<compile_context>
chip_gen: v6e
topology: v6e:2x2x1
jax: 0.10.0
libtpu: 0.0.40
codegen_flags: <defaults>
</compile_context>

<pallas_src>
import jax
import jax.numpy as jnp
from jax import lax
from jax.experimental import pallas as pl
from jax.experimental.pallas import tpu as pltpu


def _classifier_kernel(mask_ref, hs_ref, pool_w_ref, agg_w_ref,
                       clf_wT_ref, clf_b_ref, sel_ref, fold_ref,
                       out_ref, emb_acc):
    """Grid = (batch_tiles, L).  L (layer) is the innermost reduction axis."""
    l = pl.program_id(1)
    tb, s_len, h = hs_ref.shape            # static block sizes

    @pl.when(l == 0)
    def _init():
        emb_acc[...] = jnp.zeros_like(emb_acc)

    hs = hs_ref[...]                        # (tb, S, H)  native dtype (bf16/f32)
    mask = mask_ref[...]                    # (tb, S)     f32, dense 2D
    pw = pool_w_ref[l]                      # (1, H)      layer l pooling vector

    # -- LearnablePooling scores: scores[b,s] = sum_h hs[b,s,h] * pw[h].
    # VPU multiply + f32 lane reduce: no hs-sized transpose through the XLU.
    scores = jnp.sum((hs * pw).astype(jnp.float32), axis=-1)            # (tb, S)
    scores = jnp.where(mask == 0.0, jnp.finfo(jnp.float32).min, scores)

    # Masked softmax over the sequence (lane) axis; normalization deferred so
    # 1/denom fuses with the LayerAggregator weight into one per-row scale.
    # (Fully-masked rows degrade to a uniform average — same as the reference.)
    m = jnp.max(scores, axis=-1, keepdims=True)                         # (tb, 1)
    e = jnp.exp(scores - m)                                             # (tb, S)
    denom = jnp.sum(e, axis=-1, keepdims=True)                          # (tb, 1)

    # -- Weighted sum over S as ONE dense 2D MXU matmul.
    # Block-diagonal weights W[b, b*S+s] = e[b, s] (zeros elsewhere) against
    # hs collapsed to (tb*S, H): hs contracts its second-to-last dim (no
    # transpose), M = tb rows, and every operand stays dense 2D.
    # (e is cast to the hs dtype so bf16 inputs stay on the bf16 MXU path.)
    e_cast = e.astype(hs.dtype)
    e_tiled = jnp.concatenate([e_cast] * tb, axis=-1)                   # (tb, tb*S)
    col = lax.broadcasted_iota(jnp.int32, (tb, tb * s_len), 1)
    row = lax.broadcasted_iota(jnp.int32, (tb, tb * s_len), 0)
    j = col - row * s_len
    w_bd = jnp.where((j >= 0) & (j < s_len), e_tiled, jnp.zeros_like(e_tiled))
    ctx = jnp.dot(w_bd, hs.reshape(tb * s_len, h),
                  preferred_element_type=jnp.float32)                   # (tb, H)

    # softmax 1/denom (EUP approximate reciprocal — free slot) fused with the
    # LayerAggregator weight agg_w[l] (SMEM scalar) into one per-row scale.
    scale = agg_w_ref[l] * pl.reciprocal(denom, approx=True)            # (tb, 1)
    emb_acc[...] += ctx * scale                                         # (tb, H) f32

    # -- classifier heads once per batch tile, on the last layer step.
    @pl.when(l == pl.num_programs(1) - 1)
    def _finalize():
        emb = emb_acc[...]                                              # (tb, H)
        logits = jnp.dot(emb, clf_wT_ref[...],
                         preferred_element_type=jnp.float32) + clf_b_ref[...]
        masked = logits * sel_ref[...]                                  # (tb, TCp)
        out_ref[...] = jnp.dot(masked, fold_ref[...],                   # (tb, Cp)
                               preferred_element_type=jnp.float32
                               ).astype(out_ref.dtype)


def custom_classifier_forward(hidden_states, attention_mask, task_ids,
                              pool_w, agg_w, clf_w, clf_b, *, block_b=None):
    """hidden_states: (L, B, S, H) in native dtype (bf16 preferred — never
    upcast here); attention_mask: (B, S); task_ids: (B,); pool_w: (L, H);
    agg_w: (L,); clf_w: (T, max_C, H); clf_b: (T, max_C)."""
    L, B, S, H = hidden_states.shape
    T, C, _ = clf_w.shape
    hs_dtype = hidden_states.dtype
    itemsize = jnp.dtype(hs_dtype).itemsize

    # Pad S to a multiple of 8 so the in-kernel (tb, S, H) -> (tb*S, H)
    # collapse is sublane-aligned (padded positions are masked -> no effect).
    S_pad = ((S + 7) // 8) * 8
    if S_pad != S:
        hidden_states = jnp.pad(
            hidden_states, ((0, 0), (0, 0), (0, S_pad - S), (0, 0)))
        attention_mask = jnp.pad(attention_mask, ((0, 0), (0, S_pad - S)))
        S = S_pad

    TC = T * C
    TCp = ((TC + 127) // 128) * 128        # flattened heads, lane-padded
    Cp = ((C + 127) // 128) * 128          # lane-dense kernel output width

    # ---- generation-aware VMEM budgeting (v5e/v6e: 128 MiB, v7x: 64 MiB) ----
    try:
        vmem_cap = int(pltpu.get_tpu_info().vmem_capacity_bytes)
    except Exception:
        vmem_cap = 64 * 1024 * 1024        # v7x physical; safe lower bound

    # Bytes held by the resident weight blocks (default double-buffered).
    fixed_bytes = 2 * (H * TCp * 4 + 8 * TCp * 4 + TCp * Cp * 4
                       + L * 8 * max(H, 128) * itemsize)
    # Budget for the double-buffered hidden-state stream: ~half of VMEM.
    hs_budget = max(2 * S * H * itemsize, vmem_cap // 2 - fixed_bytes)

    if block_b is None:
        # Largest divisor of B that (a) keeps the hs double buffer
        # 2*block_b*S*H*itemsize within budget and (b) leaves >= 2 batch tiles
        # so the "parallel" batch axis can shard across v7x's 2 TensorCores.
        cap = max(1, hs_budget // (2 * S * H * itemsize))
        divisors = [d for d in range(1, B + 1) if B % d == 0 and d <= cap]
        multi = [d for d in divisors if B // d >= 2]
        block_b = max(multi) if multi else max(divisors)
    assert B % block_b == 0
    nb = B // block_b

    # Scoped VMEM limit: estimated footprint + headroom, clamped to the chip.
    sub = lambda n: max(n, 8)              # sublane padding of tiny blocks
    est = (2 * block_b * S * H * itemsize                 # hs double buffer
           + 2 * sub(block_b) * max(S, 128) * 4           # mask
           + 2 * sub(block_b) * TCp * 4                   # sel
           + 2 * sub(block_b) * Cp * 4                    # out
           + sub(block_b) * max(H, 128) * 4               # emb accumulator
           + 4 * block_b * block_b * S * 4                # block-diag temporaries
           + fixed_bytes)
    vmem_limit = int(min(int(0.9 * vmem_cap),
                         max(32 * 1024 * 1024, int(1.5 * est))))

    # ---- host-side reshapes (the big hs tensor is never upcast) -------------
    mask_f = attention_mask.astype(jnp.float32)                     # (B, S) 2D
    pool_w3 = pool_w.astype(hs_dtype).reshape(L, 1, H)               # resident
    agg_f = agg_w.astype(jnp.float32)                                # SMEM (L,)

    clf_wT = jnp.zeros((H, TCp), jnp.float32).at[:, :TC].set(
        clf_w.astype(jnp.float32).reshape(TC, H).T)
    clf_bp = jnp.zeros((1, TCp), jnp.float32).at[0, :TC].set(
        clf_b.astype(jnp.float32).reshape(TC))
    onehot = (task_ids[:, None] ==
              jnp.arange(T, dtype=task_ids.dtype)[None, :]).astype(jnp.float32)
    sel = jnp.zeros((B, TCp), jnp.float32).at[:, :TC].set(
        jnp.repeat(onehot, C, axis=1))          # sel[b, t*C+c] = [task_b == t]
    fold = jnp.zeros((TCp, Cp), jnp.float32).at[:TC, :C].set(
        jnp.tile(jnp.eye(C, dtype=jnp.float32), (T, 1)))

    out = pl.pallas_call(
        _classifier_kernel,
        out_shape=jax.ShapeDtypeStruct((B, Cp), jnp.float32),
        grid=(nb, L),                                   # layer = reduction, last
        in_specs=[
            pl.BlockSpec((block_b, S), lambda b, l: (b, 0)),                 # mask
            pl.BlockSpec((None, block_b, S, H), lambda b, l: (l, b, 0, 0)),  # hs
            pl.BlockSpec((L, 1, H), lambda b, l: (0, 0, 0)),                 # pool_w
            pl.BlockSpec(memory_space=pltpu.MemorySpace.SMEM),               # agg_w
            pl.BlockSpec((H, TCp), lambda b, l: (0, 0)),                     # clf_wT
            pl.BlockSpec((1, TCp), lambda b, l: (0, 0)),                     # clf_b
            pl.BlockSpec((block_b, TCp), lambda b, l: (b, 0)),               # sel
            pl.BlockSpec((TCp, Cp), lambda b, l: (0, 0)),                    # fold
        ],
        out_specs=pl.BlockSpec((block_b, Cp), lambda b, l: (b, 0)),
        scratch_shapes=[pltpu.VMEM((block_b, H), jnp.float32)],     # emb accumulator
        compiler_params=pltpu.CompilerParams(
            dimension_semantics=("parallel", "arbitrary"),
            vmem_limit_bytes=vmem_limit),
    )(mask_f, hidden_states, pool_w3, agg_f, clf_wT, clf_bp, sel, fold)

    return out[:, :C]    # drop the lane padding outside the kernel


def _reference_forward(hidden_states, attention_mask, task_ids,
                       pool_w, agg_w, clf_w, clf_b):
    """Pure-JAX reference reproducing the PyTorch semantics."""
    L, B, S, H = hidden_states.shape
    T, C, _ = clf_w.shape
    mask = attention_mask.astype(jnp.float32)
    scores = jnp.einsum("lbsh,lh->lbs", hidden_states, pool_w)
    scores = jnp.where(mask[None] == 0.0, jnp.finfo(jnp.float32).min, scores)
    w = jax.nn.softmax(scores, axis=-1)
    pooled = jnp.einsum("lbs,lbsh->lbh", w, hidden_states)            # (L,B,H)
    emb = jnp.einsum("l,lbh->bh", agg_w, pooled)                      # (B,H)
    out = jnp.zeros((B, C), jnp.float32)
    for t in range(T):
        logits_t = emb @ clf_w[t].T + clf_b[t][None, :]
        out = jnp.where((task_ids == t)[:, None], logits_t, out)
    return out


if __name__ == "__main__":
    # Small, deterministic shapes consistent with the module's forward.
    L, B, S, H = 4, 16, 8, 32         # num_hidden_layers, batch, seq, hidden
    task_config = {"task_a": 3, "task_b": 5}
    T = len(task_config)
    max_C = max(task_config.values())

    key = jax.random.PRNGKey(0)
    k_hs, k_pw, k_aw, k_cw, k_cb = jax.random.split(key, 5)

    # Synthetic backbone hidden states (stand-in for DebertaV2 outputs).
    # TODO(synk): pretrained DebertaV2Model backbone has no Pallas equivalent
    # here; the kernel starts from its per-layer hidden states.
    hidden_states = jax.random.normal(k_hs, (L, B, S, H), jnp.float32)
    lengths = 1 + (jnp.arange(B) % S)                       # varied valid lengths
    attention_mask = (jnp.arange(S)[None, :] < lengths[:, None]).astype(jnp.int32)
    task_ids = (jnp.arange(B) % T).astype(jnp.int32)

    # Deterministic parameter init (shapes from the module's __init__).
    pool_w = 0.1 * jax.random.normal(k_pw, (L, H), jnp.float32)   # LearnablePooling
    agg_w = 0.1 * jax.random.normal(k_aw, (L,), jnp.float32)      # LayerAggregator
    clf_w = jnp.zeros((T, max_C, H), jnp.float32)                 # heads, zero-padded
    clf_b = jnp.zeros((T, max_C), jnp.float32)
    for t, (name, n_cls) in enumerate(task_config.items()):
        kw, kb = jax.random.split(jax.random.fold_in(k_cw, t))
        clf_w = clf_w.at[t, :n_cls, :].set(
            0.1 * jax.random.normal(kw, (n_cls, H), jnp.float32))
        clf_b = clf_b.at[t, :n_cls].set(
            0.1 * jax.random.normal(kb, (n_cls,), jnp.float32))

    # f32 run vs f32 reference.
    out = custom_classifier_forward(hidden_states, attention_mask, task_ids,
                                    pool_w, agg_w, clf_w, clf_b)
    out = jax.block_until_ready(out)
    ref = _reference_forward(hidden_states, attention_mask, task_ids,
                             pool_w, agg_w, clf_w, clf_b)
    assert out.shape == (B, max_C)
    # Tolerance covers the EUP approximate reciprocal (~2^-12 rel) and MXU
    # pass-ordering differences vs. the XLA reference einsums.
    assert jnp.allclose(out, ref, atol=5e-3, rtol=5e-3), (out, ref)

    # bf16 end-to-end smoke run (hidden states streamed at half the HBM bytes;
    # the wrapper never upcasts them).  Compared against the reference on the
    # same bf16-rounded inputs with a bf16-appropriate tolerance.
    hs_bf16 = hidden_states.astype(jnp.bfloat16)
    out_bf16 = jax.block_until_ready(custom_classifier_forward(
        hs_bf16, attention_mask, task_ids, pool_w, agg_w, clf_w, clf_b))
    ref_bf16 = _reference_forward(hs_bf16.astype(jnp.float32), attention_mask,
                                  task_ids, pool_w, agg_w, clf_w, clf_b)
    assert jnp.allclose(out_bf16, ref_bf16, atol=3e-2, rtol=3e-2), (out_bf16,
                                                                    ref_bf16)

    print("KERNEL_OK")
</pallas_src>

<mosaic_0001>
module attributes {stable_mosaic.version = 11 : i64} {
  func.func @_classifier_kernel(%arg0: i32, %arg1: i32, %arg2: memref<8x8xf32, #tpu.memory_space<vmem>>, %arg3: memref<1x8x8x32xf32, #tpu.memory_space<vmem>>, %arg4: memref<4x1x32xf32, #tpu.memory_space<vmem>>, %arg5: memref<4xf32, #tpu.memory_space<smem>>, %arg6: memref<32x128xf32, #tpu.memory_space<vmem>>, %arg7: memref<1x128xf32, #tpu.memory_space<vmem>>, %arg8: memref<8x128xf32, #tpu.memory_space<vmem>>, %arg9: memref<128x128xf32, #tpu.memory_space<vmem>>, %arg10: memref<8x128xf32, #tpu.memory_space<vmem>>, %arg11: memref<8x32xf32, #tpu.memory_space<vmem>>) attributes {dimension_semantics = [#tpu.dimension_semantics<parallel>, #tpu.dimension_semantics<arbitrary>], iteration_bounds = array<i64: 2, 4>, scalar_prefetch = 0 : i64, scratch_operands = 1 : i64, tpu.core_type = #tpu.core_type<tc>, window_params = [{transform_indices = @transform_0, window_bounds = array<i64: 8, 8>}, {transform_indices = @transform_1, window_bounds = array<i64: 1, 8, 8, 32>}, {pipeline_mode = #tpu.pipeline_mode<synchronous>, transform_indices = @transform_2, window_bounds = array<i64: 4, 1, 32>}, {transform_indices = @transform_3, window_bounds = array<i64: 4>}, {pipeline_mode = #tpu.pipeline_mode<synchronous>, transform_indices = @transform_4, window_bounds = array<i64: 32, 128>}, {pipeline_mode = #tpu.pipeline_mode<synchronous>, transform_indices = @transform_5, window_bounds = array<i64: 1, 128>}, {transform_indices = @transform_6, window_bounds = array<i64: 8, 128>}, {pipeline_mode = #tpu.pipeline_mode<synchronous>, transform_indices = @transform_7, window_bounds = array<i64: 128, 128>}, {transform_indices = @transform_8, window_bounds = array<i64: 8, 128>}]} {
    %c0_i32 = arith.constant 0 : i32
    %0 = arith.cmpi eq, %arg1, %c0_i32 : i32
    %1 = arith.extui %0 : i1 to i32
    %c0_i32_0 = arith.constant 0 : i32
    %2 = arith.cmpi ne, %1, %c0_i32_0 : i32
    scf.if %2 {
      %cst_21 = arith.constant 0.000000e+00 : f32
      %52 = vector.broadcast %cst_21 : f32 to vector<8x32xf32>
      %c0_22 = arith.constant 0 : index
      %c0_23 = arith.constant 0 : index
      %53 = vector.load %arg11[%c0_22, %c0_23] : memref<8x32xf32, #tpu.memory_space<vmem>>, vector<8x32xf32>
      tpu.vector_store %arg11[%c0_22, %c0_23], %52 {strides = array<i32>} : memref<8x32xf32, #tpu.memory_space<vmem>>, vector<8x32xf32>,
    } else {
    }
    %c0 = arith.constant 0 : index
    %c0_1 = arith.constant 0 : index
    %c0_2 = arith.constant 0 : index
    %c0_3 = arith.constant 0 : index
    %3 = vector.load %arg3[%c0, %c0_1, %c0_2, %c0_3] : memref<1x8x8x32xf32, #tpu.memory_space<vmem>>, vector<1x8x8x32xf32>
    %4 = vector.shape_cast %3 : vector<1x8x8x32xf32> to vector<8x8x32xf32>
    %c0_4 = arith.constant 0 : index
    %c0_5 = arith.constant 0 : index
    %5 = vector.load %arg2[%c0_4, %c0_5] : memref<8x8xf32, #tpu.memory_space<vmem>>, vector<8x8xf32>
    %6 = arith.index_cast %arg1 : i32 to index
    %c0_6 = arith.constant 0 : index
    %c0_7 = arith.constant 0 : index
    %7 = vector.load %arg4[%6, %c0_6, %c0_7] : memref<4x1x32xf32, #tpu.memory_space<vmem>>, vector<1x1x32xf32>
    %8 = vector.shape_cast %7 : vector<1x1x32xf32> to vector<1x32xf32>
    %9 = vector.shape_cast %8 : vector<1x32xf32> to vector<1x1x32xf32>
    %10 = vector.broadcast %9 : vector<1x1x32xf32> to vector<8x8x32xf32>
    %11 = arith.mulf %4, %10 : vector<8x8x32xf32>
    %cst = arith.constant dense<0.000000e+00> : vector<8x8xf32>
    %12 = vector.multi_reduction <add>, %11, %cst [2] : vector<8x8x32xf32> to vector<8x8xf32>
    %cst_8 = arith.constant 0.000000e+00 : f32
    %13 = vector.broadcast %cst_8 : f32 to vector<8x8xf32>
    %14 = arith.cmpf oeq, %5, %13 : vector<8x8xf32>
    %cst_9 = arith.constant -3.40282347E+38 : f32
    %15 = vector.broadcast %cst_9 : f32 to vector<8x8xf32>
    %16 = arith.select %14, %15, %12 : vector<8x8xi1>, vector<8x8xf32>
    %cst_10 = arith.constant dense<0xFF800000> : vector<8xf32>
    %17 = vector.multi_reduction <maximumf>, %16, %cst_10 [1] : vector<8x8xf32> to vector<8xf32>
    %18 = vector.shape_cast %17 : vector<8xf32> to vector<8x1xf32>
    %19 = vector.broadcast %18 : vector<8x1xf32> to vector<8x8xf32>
    %20 = arith.subf %16, %19 : vector<8x8xf32>
    %21 = math.exp %20 : vector<8x8xf32>
    %cst_11 = arith.constant dense<0.000000e+00> : vector<8xf32>
    %22 = vector.multi_reduction <add>, %21, %cst_11 [1] : vector<8x8xf32> to vector<8xf32>
    %23 = vector.shape_cast %22 : vector<8xf32> to vector<8x1xf32>
    %24 = tpu.concatenate %21, %21, %21, %21, %21, %21, %21, %21 in 1 : vector<8x8xf32>, vector<8x8xf32>, vector<8x8xf32>, vector<8x8xf32>, vector<8x8xf32>, vector<8x8xf32>, vector<8x8xf32>, vector<8x8xf32> -> vector<8x64xf32>
    %25 = tpu.iota {dimensions = array<i32: 1>} : vector<8x64xi32>
    %26 = tpu.iota {dimensions = array<i32: 0>} : vector<8x64xi32>
    %c8_i32 = arith.constant 8 : i32
    %27 = vector.broadcast %c8_i32 : i32 to vector<8x64xi32>
    %28 = arith.muli %26, %27 : vector<8x64xi32>
    %29 = arith.subi %25, %28 : vector<8x64xi32>
    %c0_i32_12 = arith.constant 0 : i32
    %30 = vector.broadcast %c0_i32_12 : i32 to vector<8x64xi32>
    %31 = arith.cmpi sge, %29, %30 : vector<8x64xi32>
    %c8_i32_13 = arith.constant 8 : i32
    %32 = vector.broadcast %c8_i32_13 : i32 to vector<8x64xi32>
    %33 = arith.cmpi slt, %29, %32 : vector<8x64xi32>
    %34 = arith.andi %31, %33 : vector<8x64xi1>
    %cst_14 = arith.constant 0.000000e+00 : f32
    %35 = vector.broadcast %cst_14 : f32 to vector<8x64xf32>
    %36 = arith.select %34, %24, %35 : vector<8x64xi1>, vector<8x64xf32>
    %37 = vector.shape_cast %4 : vector<8x8x32xf32> to vector<64x32xf32>
    %cst_15 = arith.constant dense<0.000000e+00> : vector<8x32xf32>
    %38 = tpu.matmul %36, %37, %cst_15 {dimension_numbers = #tpu.dot_dimension_numbers<[1], [0], [0], [1], [0, 0, 1, 1], [], []>} : vector<8x64xf32>, vector<64x32xf32>, vector<8x32xf32> -> vector<8x32xf32>
    %39 = arith.index_cast %arg1 : i32 to index
    %40 = memref.load %arg5[%39] : memref<4xf32, #tpu.memory_space<smem>>
    %41 = tpu.reciprocal %23 {approx = true} : vector<8x1xf32> -> vector<8x1xf32>
    %42 = vector.broadcast %40 : f32 to vector<8x1xf32>
    %43 = arith.mulf %42, %41 : vector<8x1xf32>
    %c0_16 = arith.constant 0 : index
    %c0_17 = arith.constant 0 : index
    %44 = vector.load %arg11[%c0_16, %c0_17] : memref<8x32xf32, #tpu.memory_space<vmem>>, vector<8x32xf32>
    %45 = vector.broadcast %43 : vector<8x1xf32> to vector<8x32xf32>
    %46 = arith.mulf %38, %45 : vector<8x32xf32>
    %47 = arith.addf %44, %46 : vector<8x32xf32>
    %c0_18 = arith.constant 0 : index
    %c0_19 = arith.constant 0 : index
    %48 = vector.load %arg11[%c0_18, %c0_19] : memref<8x32xf32, #tpu.memory_space<vmem>>, vector<8x32xf32>
    tpu.vector_store %arg11[%c0_18, %c0_19], %47 {strides = array<i32>} : memref<8x32xf32, #tpu.memory_space<vmem>>, vector<8x32xf32>,
    %c3_i32 = arith.constant 3 : i32
    %49 = arith.cmpi eq, %arg1, %c3_i32 : i32
    %50 = arith.extui %49 : i1 to i32
    %c0_i32_20 = arith.constant 0 : i32
    %51 = arith.cmpi ne, %50, %c0_i32_20 : i32
    scf.if %51 {
      %c0_21 = arith.constant 0 : index
      %c0_22 = arith.constant 0 : index
      %52 = vector.load %arg11[%c0_21, %c0_22] : memref<8x32xf32, #tpu.memory_space<vmem>>, vector<8x32xf32>
      %c0_23 = arith.constant 0 : index
      %c0_24 = arith.constant 0 : index
      %53 = vector.load %arg6[%c0_23, %c0_24] : memref<32x128xf32, #tpu.memory_space<vmem>>, vector<32x128xf32>
      %cst_25 = arith.constant dense<0.000000e+00> : vector<8x128xf32>
      %54 = tpu.matmul %52, %53, %cst_25 {dimension_numbers = #tpu.dot_dimension_numbers<[1], [0], [0], [1], [0, 0, 1, 1], [], []>} : vector<8x32xf32>, vector<32x128xf32>, vector<8x128xf32> -> vector<8x128xf32>
      %c0_26 = arith.constant 0 : index
      %c0_27 = arith.constant 0 : index
      %55 = vector.load %arg7[%c0_26, %c0_27] : memref<1x128xf32, #tpu.memory_space<vmem>>, vector<1x128xf32>
      %56 = vector.broadcast %55 : vector<1x128xf32> to vector<8x128xf32>
      %57 = arith.addf %54, %56 : vector<8x128xf32>
      %c0_28 = arith.constant 0 : index
      %c0_29 = arith.constant 0 : index
      %58 = vector.load %arg8[%c0_28, %c0_29] : memref<8x128xf32, #tpu.memory_space<vmem>>, vector<8x128xf32>
      %59 = arith.mulf %57, %58 : vector<8x128xf32>
      %c0_30 = arith.constant 0 : index
      %c0_31 = arith.constant 0 : index
      %60 = vector.load %arg9[%c0_30, %c0_31] : memref<128x128xf32, #tpu.memory_space<vmem>>, vector<128x128xf32>
      %cst_32 = arith.constant dense<0.000000e+00> : vector<8x128xf32>
      %61 = tpu.matmul %59, %60, %cst_32 {dimension_numbers = #tpu.dot_dimension_numbers<[1], [0], [0], [1], [0, 0, 1, 1], [], []>} : vector<8x128xf32>, vector<128x128xf32>, vector<8x128xf32> -> vector<8x128xf32>
      %c0_33 = arith.constant 0 : index
      %c0_34 = arith.constant 0 : index
      %62 = vector.load %arg10[%c0_33, %c0_34] : memref<8x128xf32, #tpu.memory_space<vmem>>, vector<8x128xf32>
      tpu.vector_store %arg10[%c0_33, %c0_34], %61 {strides = array<i32>} : memref<8x128xf32, #tpu.memory_space<vmem>>, vector<8x128xf32>,
    } else {
    }
    return
  }
  func.func @transform_0(%arg0: i32, %arg1: i32) -> (i32, i32) {
    %c0_i32 = arith.constant 0 : i32
    %c0_i32_0 = arith.constant 0 : i32
    return %arg0, %c0_i32 : i32, i32
  }
  func.func @transform_1(%arg0: i32, %arg1: i32) -> (i32, i32, i32, i32) {
    %c0_i32 = arith.constant 0 : i32
    %c0_i32_0 = arith.constant 0 : i32
    %c0_i32_1 = arith.constant 0 : i32
    return %arg1, %arg0, %c0_i32, %c0_i32_0 : i32, i32, i32, i32
  }
  func.func @transform_2(%arg0: i32, %arg1: i32) -> (i32, i32, i32) {
    %c0_i32 = arith.constant 0 : i32
    %c0_i32_0 = arith.constant 0 : i32
    %c0_i32_1 = arith.constant 0 : i32
    %c0_i32_2 = arith.constant 0 : i32
    return %c0_i32, %c0_i32_0, %c0_i32_1 : i32, i32, i32
  }
  func.func @transform_3(%arg0: i32, %arg1: i32) -> i32 {
    %c0_i32 = arith.constant 0 : i32
    %c0_i32_0 = arith.constant 0 : i32
    return %c0_i32 : i32
  }
  func.func @transform_4(%arg0: i32, %arg1: i32) -> (i32, i32) {
    %c0_i32 = arith.constant 0 : i32
    %c0_i32_0 = arith.constant 0 : i32
    %c0_i32_1 = arith.constant 0 : i32
    return %c0_i32, %c0_i32_0 : i32, i32
  }
  func.func @transform_5(%arg0: i32, %arg1: i32) -> (i32, i32) {
    %c0_i32 = arith.constant 0 : i32
    %c0_i32_0 = arith.constant 0 : i32
    %c0_i32_1 = arith.constant 0 : i32
    return %c0_i32, %c0_i32_0 : i32, i32
  }
  func.func @transform_6(%arg0: i32, %arg1: i32) -> (i32, i32) {
    %c0_i32 = arith.constant 0 : i32
    %c0_i32_0 = arith.constant 0 : i32
    return %arg0, %c0_i32 : i32, i32
  }
  func.func @transform_7(%arg0: i32, %arg1: i32) -> (i32, i32) {
    %c0_i32 = arith.constant 0 : i32
    %c0_i32_0 = arith.constant 0 : i32
    %c0_i32_1 = arith.constant 0 : i32
    return %c0_i32, %c0_i32_0 : i32, i32
  }
  func.func @transform_8(%arg0: i32, %arg1: i32) -> (i32, i32) {
    %c0_i32 = arith.constant 0 : i32
    %c0_i32_0 = arith.constant 0 : i32
    return %arg0, %c0_i32 : i32, i32
  }
}

</mosaic_0001>

<llo_original>
// kernel: tpu_custom_call.1
$region0: #{tpu_custom_call.1}
  #allocation0 [shape = 'u32[]', space=smem, size = 0x4, offset = 0x4, fixed_abs, tag = 'smem constant byte address 0x4 - core index']
  #allocation1 [shape = 'u32[144,128]{1,0:T(1,128)}', space=vmem, size = 0x12000, scoped, tag = 'internal scratch']
  #allocation2 [shape = 'f32[8,32]{1,0:T(8,128)}', space=vmem, size = 0x1000, scoped, tag = 'scratch operand']
  %s0 = inlined_call_operand.vmem [shape: f32[16,8], index: 0, kind: input, shape index: {}]
  %s1 = inlined_call_operand.hbm [shape: f32[4,16,8,32], index: 1, kind: input, shape index: {}]
  %s2 = inlined_call_operand.vmem [shape: f32[4,1,32], index: 2, kind: input, shape index: {}]
  %s3 = inlined_call_operand.vmem [shape: f32[4], index: 3, kind: input, shape index: {}]
  %s4 = inlined_call_operand.hbm [shape: f32[32,128], index: 4, kind: input, shape index: {}]
  %s5 = inlined_call_operand.vmem [shape: f32[1,128], index: 5, kind: input, shape index: {}]
  %s6 = inlined_call_operand.vmem [shape: f32[16,128], index: 6, kind: input, shape index: {}]
  %s7 = inlined_call_operand.hbm [shape: f32[128,128], index: 7, kind: input, shape index: {}]
  %s8 = inlined_call_operand.hbm [shape: f32[16,128], index: 8, kind: output, shape index: {}]
  %s9 = sld [smem:[#allocation0]]
  $region89: #{tpu_custom_call.1} parent=0
    _
  %s11 = ssub.s32 1, %s9
  %s12 = scalar_select 0, %s11, %s9
  $region1: #{tpu_custom_call.1} parent=0
    #allocation3 [shape = 'u8[65536]{0}', space=vmem, size = 0x10000, scoped, tag = 'input window, operand 1']
    #allocation4 [shape = 's32[2]{0}', space=sflag, size = 0x8, scoped, tag = 'scoped memory for tpu_custom_call.1']
    #allocation5 [shape = 's32[2]{0}', space=sflag, size = 0x8, scoped, tag = 'scoped memory for tpu_custom_call.1']
    #allocation6 [shape = 's32[2]{0}', space=sflag, size = 0x8, scoped, tag = 'scoped memory for tpu_custom_call.1']
    #allocation7 [shape = 'u8[512]{0}', space=smem, size = 0x200, scoped, tag = 'input window, operand 3, single buffered']
    #allocation8 [shape = 'u8[16384]{0}', space=vmem, size = 0x4000, scoped, tag = 'input window, operand 4, single buffered']
    #allocation9 [shape = 's32[1]{0}', space=sflag, size = 0x4, scoped, tag = 'scoped memory for tpu_custom_call.1']
    #allocation10 [shape = 'u8[65536]{0}', space=vmem, size = 0x10000, scoped, tag = 'input window, operand 7, single buffered']
    #allocation11 [shape = 'u8[8192]{0}', space=vmem, size = 0x2000, scoped, tag = 'output window, operand 0']
    %13 = vsyncpa [#allocation4], 0
    %s14 = scalar_lea.sflag [#allocation4], 1
    %15 = vsyncpa %s14, 0
    %16 = vsyncpa [#allocation6], 0
    %17 = vsyncpa [#allocation9], 0
    %18 = vsyncpa [#allocation5], 0
    %s19 = scalar_lea.sflag [#allocation5], 1
    %20 = vsyncpa %s19, 0
    loop: start=0, step=1, limit=10
    $region2: #{tpu_custom_call.1} parent=1 // loop_pre_header
      _
    $region3: #{tpu_custom_call.1} parent=1 // loop_header
      %s22 = sphi 0, %s26
      %p23 = scmp.ge.s32.totalorder %s22, 10
      %s29 = sphi 0, %s41
      %s30 = sphi 0, %s37
      %s31 = sphi 0, %s29
      %s32 = sphi 0, %s30
      %s33 = sphi 0, %s31
      %s34 = sphi 0, %s32
      %s44 = sphi 0, %s46
      %s47 = sphi 0, %s44
      %s48 = sphi 0, %s47
      %s64 = sphi 0, %s48
      %s72 = sphi 0, %s74
      %s75 = sphi 0, %s72
      %s76 = sphi 0, %s75
      %s92 = sphi 0, %s76
      %s96 = sphi 0, %s96
      %s98 = sphi 0, %s96
      %s99 = sphi 0, %s98
      %s113 = sphi 0, %s99
      %s117 = sphi 0, %s117
      %s119 = sphi 0, %s117
      %s120 = sphi 0, %s119
      %s134 = sphi 0, %s120
      %s138 = sphi 0, %s138
      %s140 = sphi 0, %s138
      %s141 = sphi 0, %s140
      %s155 = sphi 0, %s141
      %s159 = sphi 0, %s159
      %s161 = sphi 0, %s159
      %s162 = sphi 0, %s161
      %s176 = sphi 0, %s162
      %s182 = sphi 0, %s184
      %s185 = sphi 0, %s182
      %s186 = sphi 0, %s185
      %s202 = sphi 0, %s186
      %s206 = sphi 0, %s206
      %s208 = sphi 0, %s206
      %s209 = sphi 0, %s208
      %s223 = sphi 0, %s209
      %s229 = sphi 0, %s231
      %s232 = sphi 0, %s229
      %s233 = sphi 0, %s232
      %s249 = sphi 0, %s233
    $region4: #{tpu_custom_call.1} parent=1 // loop_header_branch
      %25 = sbr.rel (%p23) target = $region8
    $region5: #{tpu_custom_call.1} parent=1 // loop_body
      %s27 = ssub.s32 %s22, 1
      %s28 = ssub.s32 %s22, 2
      %s35 = sadd.s32 1, %s30
      %p36 = scmp.ge.s32.totalorder %s35, 4
      %s37 = scalar_select %p36, 0, %s35
      %s38 = sadd.s32 1, %s29
      %s39 = scalar_select %p36, %s38, %s29
      %p40 = scmp.ge.s32.totalorder %s39, 2
      %s41 = scalar_select %p40, 0, %s39
      %s42 = ssub.s32 %s29, %s41
      %p43 = scmp.eq.s32.totalorder %s42, 0
      %s45 = sadd.s32 %s44, 1
      %s46 = scalar_select %p43, %s44, %s45
      %p49 = pneg %p43
      %p50 = scmp.eq.s32.totalorder %s22, 7
      %p51 = por %p49, %p50
      %p52 = scmp.ne.s32.totalorder %s44, %s47
      %p53 = scmp.eq.s32.totalorder %s22, 0
      %p54 = por %p52, %p53
      %p55 = scmp.ne.s32.totalorder %s44, %s47
      %p56 = scmp.eq.s32.totalorder %s27, 7
      %p57 = por %p55, %p56
      %p58 = scmp.ne.s32.totalorder %s47, %s48
      %p59 = scmp.eq.s32.totalorder %s27, 0
      %p60 = por %p58, %p59
      %p61 = scmp.ne.s32.totalorder %s47, %s48
      %p62 = scmp.eq.s32.totalorder %s28, 7
      %p63 = por %p61, %p62
      %p65 = scmp.ne.s32.totalorder %s48, %s64
      %p66 = scmp.eq.s32.totalorder %s28, 0
      %p67 = por %p65, %p66
      %s68 = ssub.s32 %s30, %s37
      %s69 = ssub.s32 %s29, %s41
      %s70 = sor.u32 %s68, %s69
      %p71 = scmp.eq.s32.totalorder %s70, 0
      %s73 = sadd.s32 %s72, 1
      %s74 = scalar_select %p71, %s72, %s73
      %p77 = pneg %p71
      %p78 = scmp.eq.s32.totalorder %s22, 7
      %p79 = por %p77, %p78
      %p80 = scmp.ne.s32.totalorder %s72, %s75
      %p81 = scmp.eq.s32.totalorder %s22, 0
      %p82 = por %p80, %p81
      %p83 = scmp.ne.s32.totalorder %s72, %s75
      %p84 = scmp.eq.s32.totalorder %s27, 7
      %p85 = por %p83, %p84
      %p86 = scmp.ne.s32.totalorder %s75, %s76
      %p87 = scmp.eq.s32.totalorder %s27, 0
      %p88 = por %p86, %p87
      %p89 = scmp.ne.s32.totalorder %s75, %s76
      %p90 = scmp.eq.s32.totalorder %s28, 7
      %p91 = por %p89, %p90
      %p93 = scmp.ne.s32.totalorder %s76, %s92
      %p94 = scmp.eq.s32.totalorder %s28, 0
      %p95 = por %p93, %p94
      %s97 = sadd.s32 %s96, 1
      %p100 = scmp.eq.s32.totalorder %s22, 7
      %p101 = scmp.ne.s32.totalorder %s96, %s98
      %p102 = scmp.eq.s32.totalorder %s22, 0
      %p103 = por %p101, %p102
      %p104 = scmp.ne.s32.totalorder %s96, %s98
      %p105 = scmp.eq.s32.totalorder %s27, 7
      %p106 = por %p104, %p105
      %p107 = scmp.ne.s32.totalorder %s98, %s99
      %p108 = scmp.eq.s32.totalorder %s27, 0
      %p109 = por %p107, %p108
      %p110 = scmp.ne.s32.totalorder %s98, %s99
      %p111 = scmp.eq.s32.totalorder %s28, 7
      %p112 = por %p110, %p111
      %p114 = scmp.ne.s32.totalorder %s99, %s113
      %p115 = scmp.eq.s32.totalorder %s28, 0
      %p116 = por %p114, %p115
      %s118 = sadd.s32 %s117, 1
      %p121 = scmp.eq.s32.totalorder %s22, 7
      %p122 = scmp.ne.s32.totalorder %s117, %s119
      %p123 = scmp.eq.s32.totalorder %s22, 0
      %p124 = por %p122, %p123
      %p125 = scmp.ne.s32.totalorder %s117, %s119
      %p126 = scmp.eq.s32.totalorder %s27, 7
      %p127 = por %p125, %p126
      %p128 = scmp.ne.s32.totalorder %s119, %s120
      %p129 = scmp.eq.s32.totalorder %s27, 0
      %p130 = por %p128, %p129
      %p131 = scmp.ne.s32.totalorder %s119, %s120
      %p132 = scmp.eq.s32.totalorder %s28, 7
      %p133 = por %p131, %p132
      %p135 = scmp.ne.s32.totalorder %s120, %s134
      %p136 = scmp.eq.s32.totalorder %s28, 0
      %p137 = por %p135, %p136
      %s139 = sadd.s32 %s138, 1
      %p142 = scmp.eq.s32.totalorder %s22, 7
      %p143 = scmp.ne.s32.totalorder %s138, %s140
      %p144 = scmp.eq.s32.totalorder %s22, 0
      %p145 = por %p143, %p144
      %p146 = scmp.ne.s32.totalorder %s138, %s140
      %p147 = scmp.eq.s32.totalorder %s27, 7
      %p148 = por %p146, %p147
      %p149 = scmp.ne.s32.totalorder %s140, %s141
      %p150 = scmp.eq.s32.totalorder %s27, 0
      %p151 = por %p149, %p150
      %p152 = scmp.ne.s32.totalorder %s140, %s141
      %p153 = scmp.eq.s32.totalorder %s28, 7
      %p154 = por %p152, %p153
      %p156 = scmp.ne.s32.totalorder %s141, %s155
      %p157 = scmp.eq.s32.totalorder %s28, 0
      %p158 = por %p156, %p157
      %s160 = sadd.s32 %s159, 1
      %p163 = scmp.eq.s32.totalorder %s22, 7
      %p164 = scmp.ne.s32.totalorder %s159, %s161
      %p165 = scmp.eq.s32.totalorder %s22, 0
      %p166 = por %p164, %p165
      %p167 = scmp.ne.s32.totalorder %s159, %s161
      %p168 = scmp.eq.s32.totalorder %s27, 7
      %p169 = por %p167, %p168
      %p170 = scmp.ne.s32.totalorder %s161, %s162
      %p171 = scmp.eq.s32.totalorder %s27, 0
      %p172 = por %p170, %p171
      %p173 = scmp.ne.s32.totalorder %s161, %s162
      %p174 = scmp.eq.s32.totalorder %s28, 7
      %p175 = por %p173, %p174
      %p177 = scmp.ne.s32.totalorder %s162, %s176
      %p178 = scmp.eq.s32.totalorder %s28, 0
      %p179 = por %p177, %p178
      %s180 = ssub.s32 %s29, %s41
      %p181 = scmp.eq.s32.totalorder %s180, 0
      %s183 = sadd.s32 %s182, 1
      %s184 = scalar_select %p181, %s182, %s183
      %p187 = pneg %p181
      %p188 = scmp.eq.s32.totalorder %s22, 7
      %p189 = por %p187, %p188
      %p190 = scmp.ne.s32.totalorder %s182, %s185
      %p191 = scmp.eq.s32.totalorder %s22, 0
      %p192 = por %p190, %p191
      %p193 = scmp.ne.s32.totalorder %s182, %s185
      %p194 = scmp.eq.s32.totalorder %s27, 7
      %p195 = por %p193, %p194
      %p196 = scmp.ne.s32.totalorder %s185, %s186
      %p197 = scmp.eq.s32.totalorder %s27, 0
      %p198 = por %p196, %p197
      %p199 = scmp.ne.s32.totalorder %s185, %s186
      %p200 = scmp.eq.s32.totalorder %s28, 7
      %p201 = por %p199, %p200
      %p203 = scmp.ne.s32.totalorder %s186, %s202
      %p204 = scmp.eq.s32.totalorder %s28, 0
      %p205 = por %p203, %p204
      %s207 = sadd.s32 %s206, 1
      %p210 = scmp.eq.s32.totalorder %s22, 7
      %p211 = scmp.ne.s32.totalorder %s206, %s208
      %p212 = scmp.eq.s32.totalorder %s22, 0
      %p213 = por %p211, %p212
      %p214 = scmp.ne.s32.totalorder %s206, %s208
      %p215 = scmp.eq.s32.totalorder %s27, 7
      %p216 = por %p214, %p215
      %p217 = scmp.ne.s32.totalorder %s208, %s209
      %p218 = scmp.eq.s32.totalorder %s27, 0
      %p219 = por %p217, %p218
      %p220 = scmp.ne.s32.totalorder %s208, %s209
      %p221 = scmp.eq.s32.totalorder %s28, 7
      %p222 = por %p220, %p221
      %p224 = scmp.ne.s32.totalorder %s209, %s223
      %p225 = scmp.eq.s32.totalorder %s28, 0
      %p226 = por %p224, %p225
      %s227 = ssub.s32 %s29, %s41
      %p228 = scmp.eq.s32.totalorder %s227, 0
      %s230 = sadd.s32 %s229, 1
      %s231 = scalar_select %p228, %s229, %s230
      %p234 = pneg %p228
      %p235 = scmp.eq.s32.totalorder %s22, 7
      %p236 = por %p234, %p235
      %p237 = scmp.ne.s32.totalorder %s229, %s232
      %p238 = scmp.eq.s32.totalorder %s22, 0
      %p239 = por %p237, %p238
      %p240 = scmp.ne.s32.totalorder %s229, %s232
      %p241 = scmp.eq.s32.totalorder %s27, 7
      %p242 = por %p240, %p241
      %p243 = scmp.ne.s32.totalorder %s232, %s233
      %p244 = scmp.eq.s32.totalorder %s27, 0
      %p245 = por %p243, %p244
      %p246 = scmp.ne.s32.totalorder %s232, %s233
      %p247 = scmp.eq.s32.totalorder %s28, 7
      %p248 = por %p246, %p247
      %p250 = scmp.ne.s32.totalorder %s233, %s249
      %p251 = scmp.eq.s32.totalorder %s28, 0
      %p252 = por %p250, %p251
      %p253 = scmp.le.s32.totalorder 1, %s22
      %p254 = scmp.lt.s32.totalorder %s22, 9
      %p255 = pnand %p253, %p254
      %p256 = pneg %p255
      // Predicated region
      $region9: #{tpu_custom_call.1} parent=5 // pred_check
        _
      $region10: #{tpu_custom_call.1} parent=5 // pred_check_branch
        %258 = sbr.rel (%p255) target = $region12
      $region11: #{tpu_custom_call.1} parent=5 // pred_region
        %s259 = ssub.s32 %s22, 1
        // Predicated region
        $region13: #{tpu_custom_call.1} parent=11 // pred_check
          %p260 = pneg %p109
        $region14: #{tpu_custom_call.1} parent=11 // pred_check_branch
          %262 = sbr.rel (%p260) target = $region16
        $region15: #{tpu_custom_call.1} parent=11 // pred_region
          _
        $region16: #{tpu_custom_call.1} parent=11 // pred_fallthru
          _
        // Predicated region
        $region17: #{tpu_custom_call.1} parent=11 // pred_check
          %p263 = pneg %p130
        $region18: #{tpu_custom_call.1} parent=11 // pred_check_branch
          %265 = sbr.rel (%p263) target = $region20
        $region19: #{tpu_custom_call.1} parent=11 // pred_region
          %s267 = ssub.s32 16, 16
          %268 = vsyncadd [#allocation6], %s267
          %s270 = sshll.u32 %s3, 4
          %s271 = int_to_ptr.vmem [resolvable:$true] %s270
          %273 = dma.vmem_to_smem %s271, 16, [#allocation7], [#allocation6]
        $region20: #{tpu_custom_call.1} parent=11 // pred_fallthru
          _
        // Predicated region
        $region21: #{tpu_custom_call.1} parent=11 // pred_check
          %p274 = pneg %p151
        $region22: #{tpu_custom_call.1} parent=11 // pred_check_branch
          %276 = sbr.rel (%p274) target = $region24
        $region23: #{tpu_custom_call.1} parent=11 // pred_region
          %s278 = ssub.s32 512, 512
          %279 = vsyncadd [#allocation9], %s278
          %s280 = sshll.u32 [#allocation8], 4
          %s281 = int_to_ptr.vmem [resolvable:$true] %s280
          %286 = dma.hbm_to_vmem [thread:$0]  %s4, 512, %s281, [#allocation9], 128, 128, 8
        $region24: #{tpu_custom_call.1} parent=11 // pred_fallthru
          _
        // Predicated region
        $region25: #{tpu_custom_call.1} parent=11 // pred_check
          %p287 = pneg %p172
        $region26: #{tpu_custom_call.1} parent=11 // pred_check_branch
          %289 = sbr.rel (%p287) target = $region28
        $region27: #{tpu_custom_call.1} parent=11 // pred_region
          _
        $region28: #{tpu_custom_call.1} parent=11 // pred_fallthru
          _
        // Predicated region
        $region29: #{tpu_custom_call.1} parent=11 // pred_check
          %p290 = pneg %p219
        $region30: #{tpu_custom_call.1} parent=11 // pred_check_branch
          %292 = sbr.rel (%p290) target = $region32
        $region31: #{tpu_custom_call.1} parent=11 // pred_region
          %s294 = ssub.s32 2048, 2048
          %295 = vsyncadd [#allocation9], %s294
          %s296 = sshll.u32 [#allocation10], 4
          %s297 = int_to_ptr.vmem [resolvable:$true] %s296
          %302 = dma.hbm_to_vmem [thread:$0]  %s7, 2048, %s297, [#allocation9], 128, 128, 8
        $region32: #{tpu_custom_call.1} parent=11 // pred_fallthru
          _
      $region12: #{tpu_custom_call.1} parent=5 // pred_fallthru
        _
      %p303 = scmp.lt.s32.totalorder %s22, 8
      // Predicated region
      $region33: #{tpu_custom_call.1} parent=5 // pred_check
        %p304 = pneg %p303
      $region34: #{tpu_custom_call.1} parent=5 // pred_check_branch
        %306 = sbr.rel (%p304) target = $region36
      $region35: #{tpu_custom_call.1} parent=5 // pred_region
        // Predicated region
        $region37: #{tpu_custom_call.1} parent=35 // pred_check
          %p307 = pneg %p54
        $region38: #{tpu_custom_call.1} parent=35 // pred_check_branch
          %309 = sbr.rel (%p307) target = $region40
        $region39: #{tpu_custom_call.1} parent=35 // pred_region
          %p310 = scmp.lt.s32.totalorder %s29, 1
          %s311 = scalar_select %p310, %s29, 1
          %s312 = smul.addr %s311, 8
          %s313 = scalar_lea.vmem %s0, %s312
        $region40: #{tpu_custom_call.1} parent=35 // pred_fallthru
          _
        // Predicated region
        $region41: #{tpu_custom_call.1} parent=35 // pred_check
          %p314 = pneg %p82
        $region42: #{tpu_custom_call.1} parent=35 // pred_check_branch
          %316 = sbr.rel (%p314) target = $region44
        $region43: #{tpu_custom_call.1} parent=35 // pred_region
          %s317 = sand.u32 %s72, 1
          %s318 = scalar_lea.sflag [#allocation4], %s317
          %s319 = sand.u32 %s72, 1
          %s320 = smul.addr %s319, 64
          %s321 = scalar_lea.vmem [#allocation3], %s320
          %s322 = smul.u32 8, %s29
          %s324 = ssub.s32 1024, 1024
          %325 = vsyncadd %s318, %s324
          %s326 = smul.addr %s30, 16
          %s327 = sadd.s32 %s322, %s326
          %s328 = smul.addr %s327, 128
          %s329 = scalar_lea.hbm %s1, %s328
          %s330 = sshll.u32 %s321, 4
          %s331 = int_to_ptr.vmem [resolvable:$true] %s330
          %336 = dma.hbm_to_vmem [thread:$0]  %s329, 1024, %s331, %s318, 128, 128, 8
        $region44: #{tpu_custom_call.1} parent=35 // pred_fallthru
          _
        // Predicated region
        $region45: #{tpu_custom_call.1} parent=35 // pred_check
          %p337 = pneg %p192
        $region46: #{tpu_custom_call.1} parent=35 // pred_check_branch
          %339 = sbr.rel (%p337) target = $region48
        $region47: #{tpu_custom_call.1} parent=35 // pred_region
          %p340 = scmp.lt.s32.totalorder %s29, 1
          %s341 = scalar_select %p340, %s29, 1
          %s342 = smul.addr %s341, 8
          %s343 = scalar_lea.vmem %s6, %s342
        $region48: #{tpu_custom_call.1} parent=35 // pred_fallthru
          _
      $region36: #{tpu_custom_call.1} parent=5 // pred_fallthru
        _
      %p344 = scmp.le.s32.totalorder 1, %s22
      %p345 = scmp.lt.s32.totalorder %s22, 9
      %p346 = pnand %p344, %p345
      %p347 = pneg %p346
      // Predicated region
      $region49: #{tpu_custom_call.1} parent=5 // pred_check
        _
      $region50: #{tpu_custom_call.1} parent=5 // pred_check_branch
        %349 = sbr.rel (%p346) target = $region52
      $region51: #{tpu_custom_call.1} parent=5 // pred_region
        %s350 = ssub.s32 %s22, 1
        %s351 = sand.u32 %s75, 1
        %s352 = scalar_lea.sflag [#allocation4], %s351
        %s353 = sand.u32 %s75, 1
        %s354 = smul.addr %s353, 64
        %s355 = scalar_lea.vmem [#allocation3], %s354
        // Predicated region
        $region53: #{tpu_custom_call.1} parent=51 // pred_check
          %p356 = pneg %p88
        $region54: #{tpu_custom_call.1} parent=51 // pred_check_branch
          %358 = sbr.rel (%p356) target = $region56
        $region55: #{tpu_custom_call.1} parent=51 // pred_region
          %359 = dma.done %s352, 1024
        $region56: #{tpu_custom_call.1} parent=51 // pred_fallthru
          _
        // Predicated region
        $region57: #{tpu_custom_call.1} parent=51 // pred_check
          %p360 = pneg %p130
        $region58: #{tpu_custom_call.1} parent=51 // pred_check_branch
          %362 = sbr.rel (%p360) target = $region60
        $region59: #{tpu_custom_call.1} parent=51 // pred_region
          %363 = dma.done [#allocation6], 16
        $region60: #{tpu_custom_call.1} parent=51 // pred_fallthru
          _
        // Predicated region
        $region61: #{tpu_custom_call.1} parent=51 // pred_check
          %p364 = pneg %p151
        $region62: #{tpu_custom_call.1} parent=51 // pred_check_branch
          %366 = sbr.rel (%p364) target = $region64
        $region63: #{tpu_custom_call.1} parent=51 // pred_region
          %367 = dma.done [#allocation9], 512
        $region64: #{tpu_custom_call.1} parent=51 // pred_fallthru
          _
        // Predicated region
        $region65: #{tpu_custom_call.1} parent=51 // pred_check
          %p368 = pneg %p219
        $region66: #{tpu_custom_call.1} parent=51 // pred_check_branch
          %370 = sbr.rel (%p368) target = $region68
        $region67: #{tpu_custom_call.1} parent=51 // pred_region
          %371 = dma.done [#allocation9], 2048
        $region68: #{tpu_custom_call.1} parent=51 // pred_fallthru
          _
        %372 = sfence
        %p373 = scmp.lt.s32.totalorder %s31, 1
        %s374 = scalar_select %p373, %s31, 1
        %s375 = smul.addr %s374, 8
        %s376 = scalar_lea.vmem %s0, %s375
        %p377 = pneg %p60
        %p378 = pneg %p57
        %s379 = sand.u32 %s75, 1
        %s380 = scalar_lea.sflag [#allocation4], %s379
        %s381 = sand.u32 %s75, 1
        %s382 = smul.addr %s381, 64
        %s383 = scalar_lea.vmem [#allocation3], %s382
        %p384 = pneg %p88
        %p385 = pneg %p85
        %p386 = pneg %p109
        %p387 = pneg %p106
        %p388 = pneg %p130
        %p389 = pneg %p127
        %p390 = pneg %p151
        %p391 = pneg %p148
        %p392 = pneg %p172
        %p393 = pneg %p169
        %p394 = scmp.lt.s32.totalorder %s31, 1
        %s395 = scalar_select %p394, %s31, 1
        %s396 = smul.addr %s395, 8
        %s397 = scalar_lea.vmem %s6, %s396
        %p398 = pneg %p198
        %p399 = pneg %p195
        %p400 = pneg %p219
        %p401 = pneg %p216
        %p402 = pneg %p245
        %p403 = pneg %p242
        %s404 = sand.u32 %s232, 1
        %s405 = scalar_lea.sflag [#allocation5], %s404
        %s406 = sand.u32 %s232, 1
        %s407 = smul.addr %s406, 8
        %s408 = scalar_lea.vmem [#allocation11], %s407
        %p409 = scmp.lt.s32.totalorder %s31, 1
        %s410 = scalar_select %p409, %s31, 1
        %s411 = smul.addr %s410, 8
        %s412 = scalar_lea.vmem %s0, %s411
        %s413 = smul.u32 8, %s31
        %p414 = scmp.lt.s32.totalorder %s31, 1
        %s415 = scalar_select %p414, %s31, 1
        %s416 = smul.addr %s415, 8
        %s417 = scalar_lea.vmem %s6, %s416
        %p418 = scmp.eq.s32.totalorder %s32, 0
        // Predicated region
        $region69: #{tpu_custom_call.1} parent=51 // pred_check
          %p419 = pneg %p418
        $region70: #{tpu_custom_call.1} parent=51 // pred_check_branch
          %421 = sbr.rel (%p419) target = $region72
        $region71: #{tpu_custom_call.1} parent=51 // pred_region
          %vm422 = vcmask 261120
          %423 = vst.msk [vmem:[#allocation2] sm:$0xff] %vm422, 0.0
        $region72: #{tpu_custom_call.1} parent=51 // pred_fallthru
          _
        %v424 = vld [vmem:[%s355] sm:$0xff]
        %v425 = vld [vmem:[%s355 + $0x8] sm:$0xff]
        %v426 = vld [vmem:[%s355 + $0x10] sm:$0xff]
        %v427 = vld [vmem:[%s355 + $0x18] sm:$0xff]
        %v428 = vld [vmem:[%s355 + $0x20] sm:$0xff]
        %v429 = vld [vmem:[%s355 + $0x28] sm:$0xff]
        %v430 = vld [vmem:[%s355 + $0x30] sm:$0xff]
        %v431 = vld [vmem:[%s355 + $0x38] sm:$0xff]
        %v432 = vld [vmem:[%s412] sm:$0xff]
        %s433 = scalar_lea.vmem %s2, %s32
        %v434 = vld [vmem:[%s433] sm:$0x1]
        %v436 = vlaneseq
        %v437 = vshrl.u32 %v436, 7
        %v438 = vsub.s32 0, %v437
        %v439 = vrot.slane %v434, %v438
        %v441 = vmul.f32 %v424, %v439
        %v442 = vmul.f32 %v425, %v439
        %v443 = vmul.f32 %v426, %v439
        %v444 = vmul.f32 %v427, %v439
        %v445 = vmul.f32 %v428, %v439
        %v446 = vmul.f32 %v429, %v439
        %v447 = vmul.f32 %v430, %v439
        %v448 = vmul.f32 %v431, %v439
        %vm449 = vcmask 261120
        %v450 = vsel %vm449, %v441, 0.0
        %451 = vadd.xlane.f32.xlu0 %v450
        %v452 = vpop.xlane.xlu0 %451
        %v453 = vsel %vm449, %v442, 0.0
        %454 = vadd.xlane.f32.xlu0 %v453
        %v455 = vpop.xlane.xlu0 %454
        %v456 = vsel %vm449, %v443, 0.0
        %457 = vadd.xlane.f32.xlu0 %v456
        %v458 = vpop.xlane.xlu0 %457
        %v459 = vsel %vm449, %v444, 0.0
        %460 = vadd.xlane.f32.xlu0 %v459
        %v461 = vpop.xlane.xlu0 %460
        %v462 = vsel %vm449, %v445, 0.0
        %463 = vadd.xlane.f32.xlu0 %v462
        %v464 = vpop.xlane.xlu0 %463
        %v465 = vsel %vm449, %v446, 0.0
        %466 = vadd.xlane.f32.xlu0 %v465
        %v467 = vpop.xlane.xlu0 %466
        %v468 = vsel %vm449, %v447, 0.0
        %469 = vadd.xlane.f32.xlu0 %v468
        %v470 = vpop.xlane.xlu0 %469
        %v471 = vsel %vm449, %v448, 0.0
        %472 = vadd.xlane.f32.xlu0 %v471
        %v473 = vpop.xlane.xlu0 %472
        %vm474 = vcmp.eq.f32.partialorder %v432, 0.0
        %v483 = vlaneseq
        %v484 = vand.u32 %v483, 127
        %v485 = vlaneseq
        %v486 = vshrl.u32 %v485, 7
        %v487 = vsub.s32 %v484, %v486
        %v488 = vrot.slane %v452, %v487
        %v489 = vlaneseq
        %v490 = vshrl.u32 %v489, 7
        %v491 = vsub.s32 %v484, %v490
        %v492 = vrot.slane %v455, %v491
        %v493 = vlaneseq
        %v494 = vshrl.u32 %v493, 7
        %v495 = vsub.s32 %v484, %v494
        %v496 = vrot.slane %v458, %v495
        %v497 = vlaneseq
        %v498 = vshrl.u32 %v497, 7
        %v499 = vsub.s32 %v484, %v498
        %v500 = vrot.slane %v461, %v499
        %v501 = vlaneseq
        %v502 = vshrl.u32 %v501, 7
        %v503 = vsub.s32 %v484, %v502
        %v504 = vrot.slane %v464, %v503
        %v505 = vlaneseq
        %v506 = vshrl.u32 %v505, 7
        %v507 = vsub.s32 %v484, %v506
        %v508 = vrot.slane %v467, %v507
        %v509 = vlaneseq
        %v510 = vshrl.u32 %v509, 7
        %v511 = vsub.s32 %v484, %v510
        %v512 = vrot.slane %v470, %v511
        %v513 = vlaneseq
        %v514 = vshrl.u32 %v513, 7
        %v515 = vsub.s32 %v484, %v514
        %v516 = vrot.slane %v473, %v515
        %vm517 = vcmask 1041409
        %v518 = vsel %vm517, %v492, %v488
        %vm519 = vcmask 1042434
        %v520 = vsel %vm519, %v496, %v518
        %vm521 = vcmask 1043459
        %v522 = vsel %vm521, %v500, %v520
        %vm523 = vcmask 1044484
        %v524 = vsel %vm523, %v504, %v522
        %vm525 = vcmask 1045509
        %v526 = vsel %vm525, %v508, %v524
        %vm527 = vcmask 1046534
        %v528 = vsel %vm527, %v512, %v526
        %vm529 = vcmask 1047559
        %v530 = vsel %vm529, %v516, %v528
        %v532 = vsel %vm474, -3.4028235e+38, %v530
        %vm533 = vcmask 64512
        %v534 = vsel %vm533, %v532, -inf
        %535 = vmax.xlane.f32.xlu0 %v534
        %v536 = vpop.xlane.xlu0 %535
        %v537 = vsub.f32 %v532, %v536
        %v538 = vmul.f32 %v537, 1.442695
        %v539 = vpow.pop %v538
        %v540 = vsel %vm533, %v539, 0.0
        %541 = vadd.xlane.f32.xlu0 %v540
        %v542 = vpop.xlane.xlu0 %541
        %544 = vrot.lane.b32.xlu0 %v539, 8
        %v545 = vpop.permute.xlu0 %544
        %547 = vrot.lane.b32.xlu0 %v539, 16
        %v548 = vpop.permute.xlu0 %547
        %550 = vrot.lane.b32.xlu0 %v539, 24
        %v551 = vpop.permute.xlu0 %550
        %553 = vrot.lane.b32.xlu0 %v539, 32
        %v554 = vpop.permute.xlu0 %553
        %556 = vrot.lane.b32.xlu0 %v539, 40
        %v557 = vpop.permute.xlu0 %556
        %559 = vrot.lane.b32.xlu0 %v539, 48
        %v560 = vpop.permute.xlu0 %559
        %562 = vrot.lane.b32.xlu0 %v539, 56
        %v563 = vpop.permute.xlu0 %562
        %v565 = vsel %vm533, %v539, %v545
        %vm566 = vcmask 130048
        %v567 = vsel %vm566, %v565, %v548
        %vm568 = vcmask 195584
        %v569 = vsel %vm568, %v567, %v551
        %v570 = vsel %vm449, %v569, %v554
        %vm571 = vcmask 326656
        %v572 = vsel %vm571, %v570, %v557
        %vm573 = vcmask 392192
        %v574 = vsel %vm573, %v572, %v560
        %vm575 = vcmask 457728
        %v576 = vsel %vm575, %v574, %v563
        %v577 = vlaneseq
        %v578 = vshrl.u32 %v577, 7
        %v579 = vmul.u32 %v578, 8
        %v580 = vsub.s32 %v484, %v579
        %vm581 = vcmp.ge.s32.totalorder %v580, 0
        %vm582 = vcmp.lt.s32.totalorder %v580, 8
        %vm583 = vmand %vm581, %vm582
        %v584 = vsel %vm583, %v576, 0.0
        %vm585 = vcmask 523264
        %v587 = vsel %vm585, %v584, 0
        %589 = vmatprep.subr.mxu0 0.0
        %590 = vmatpush1.msra.mxu0 0.0
        %591 = vmatprep.subr.mxu0 0.0
        %592 = vmatpush1.msra.mxu0 0.0
        %593 = vmatprep.subr.mxu0 0.0
        %594 = vmatpush1.msra.mxu0 0.0
        %595 = vmatprep.subr.mxu0 0.0
        %596 = vmatpush1.msra.mxu0 0.0
        %597 = vmatprep.subr.mxu0 0.0
        %598 = vmatpush1.msra.mxu0 0.0
        %599 = vmatprep.subr.mxu0 0.0
        %600 = vmatpush1.msra.mxu0 0.0
        %601 = vmatprep.subr.mxu0 0.0
        %602 = vmatpush1.msra.mxu0 0.0
        %603 = vmatprep.subr.mxu0 0.0
        %604 = vmatpush1.msra.mxu0 0.0
        %605 = vmatprep.subr.mxu0 0.0
        %606 = vmatpush1.msra.mxu0 %v431
        %607 = vmatprep.subr.mxu0 0.0
        %608 = vmatpush1.msra.mxu0 %v430
        %609 = vmatprep.subr.mxu0 0.0
        %610 = vmatpush1.msra.mxu0 %v429
        %611 = vmatprep.subr.mxu0 0.0
        %612 = vmatpush1.msra.mxu0 %v428
        %613 = vmatprep.subr.mxu0 0.0
        %614 = vmatpush1.msra.mxu0 %v427
        %615 = vmatprep.subr.mxu0 0.0
        %616 = vmatpush1.msra.mxu0 %v426
        %617 = vmatprep.subr.mxu0 0.0
        %618 = vmatpush1.msra.mxu0 %v425
        %619 = vmatprep.subr.mxu0 0.0
        %620 = vmatpush1.msra.mxu0 %v424
        %621 = vmatprep.subr.mxu0 0.0
        %622 = vmatpush2.msra.mxu0 0.0
        %623 = vmatprep.subr.mxu0 0.0
        %624 = vmatpush2.msra.mxu0 0.0
        %625 = vmatprep.subr.mxu0 0.0
        %626 = vmatpush2.msra.mxu0 0.0
        %627 = vmatprep.subr.mxu0 0.0
        %628 = vmatpush2.msra.mxu0 0.0
        %629 = vmatprep.subr.mxu0 0.0
        %630 = vmatpush2.msra.mxu0 0.0
        %631 = vmatprep.subr.mxu0 0.0
        %632 = vmatpush2.msra.mxu0 0.0
        %633 = vmatprep.subr.mxu0 0.0
        %634 = vmatpush2.msra.mxu0 0.0
        %635 = vmatprep.subr.mxu0 0.0
        %636 = vmatpush2.msra.mxu0 0.0
        %637 = vmatprep.subr.mxu0 0.0
        %638 = vmatpush2.msra.mxu0 0.0
        %639 = vmatprep.subr.mxu0 0.0
        %640 = vmatpush2.msra.mxu0 0.0
        %641 = vmatprep.subr.mxu0 0.0
        %642 = vmatpush2.msra.mxu0 0.0
        %643 = vmatprep.subr.mxu0 0.0
        %644 = vmatpush2.msra.mxu0 0.0
        %645 = vmatprep.subr.mxu0 0.0
        %646 = vmatpush2.msra.mxu0 0.0
        %647 = vmatprep.subr.mxu0 0.0
        %648 = vmatpush2.msra.mxu0 0.0
        %649 = vmatprep.subr.mxu0 0.0
        %650 = vmatpush2.msra.mxu0 0.0
        %651 = vmatprep.subr.mxu0 0.0
        %652 = vmatpush2.msra.mxu0 0.0
        %653 = vmatprep.mubr.f32.mxu0 0.0
        %654 = vmatmul.mubr.f32.gmra.mxu0 %v587
        %v655 = vpop.f32.mrf.mxu0
        %v656 = vadd.f32 0.0, %v655
        %v657 = vpop.f32.mrf.mxu0
        %658 = vdwg.mxu0
        %s659 = sld [smem:[#allocation7 + %s32]]
        %v660 = vrcp.pop %v542
        %v661 = vstv %s659
        %v662 = vmul.f32 %v661, %v660
        %v663 = vld [vmem:[#allocation2] sm:$0xff]
        %v664 = vmul.f32 %v656, %v662
        %v665 = vadd.f32 %v663, %v664
        %666 = vst.msk [vmem:[#allocation2] sm:$0xff] %vm449, %v665
        %p667 = scmp.eq.s32.totalorder %s32, 3
        // Predicated region
        $region73: #{tpu_custom_call.1} parent=51 // pred_check
          %p668 = pneg %p667
        $region74: #{tpu_custom_call.1} parent=51 // pred_check_branch
          %670 = sbr.rel (%p668) target = $region76
        $region75: #{tpu_custom_call.1} parent=51 // pred_region
          %v671 = vld [vmem:[#allocation2] sm:$0xff]
          %v672 = vld [vmem:[#allocation8] sm:$0xff]
          %v673 = vld [vmem:[#allocation8 + $0x8] sm:$0xff]
          %v674 = vld [vmem:[#allocation8 + $0x10] sm:$0xff]
          %v675 = vld [vmem:[#allocation8 + $0x18] sm:$0xff]
          %v676 = vld [vmem:[%s5] sm:$0x1]
          %v678 = vlaneseq
          %v679 = vshrl.u32 %v678, 7
          %v680 = vsub.s32 0, %v679
          %v681 = vrot.slane %v676, %v680
          %v684 = vsel %vm449, %v671, 0
          %686 = vmatprep.subr.mxu0 0.0
          %687 = vmatpush1.msra.mxu0 0.0
          %688 = vmatprep.subr.mxu0 0.0
          %689 = vmatpush1.msra.mxu0 0.0
          %690 = vmatprep.subr.mxu0 0.0
          %691 = vmatpush1.msra.mxu0 0.0
          %692 = vmatprep.subr.mxu0 0.0
          %693 = vmatpush1.msra.mxu0 0.0
          %694 = vmatprep.subr.mxu0 0.0
          %695 = vmatpush1.msra.mxu0 0.0
          %696 = vmatprep.subr.mxu0 0.0
          %697 = vmatpush1.msra.mxu0 0.0
          %698 = vmatprep.subr.mxu0 0.0
          %699 = vmatpush1.msra.mxu0 0.0
          %700 = vmatprep.subr.mxu0 0.0
          %701 = vmatpush1.msra.mxu0 0.0
          %702 = vmatprep.subr.mxu0 0.0
          %703 = vmatpush1.msra.mxu0 0.0
          %704 = vmatprep.subr.mxu0 0.0
          %705 = vmatpush1.msra.mxu0 0.0
          %706 = vmatprep.subr.mxu0 0.0
          %707 = vmatpush1.msra.mxu0 0.0
          %708 = vmatprep.subr.mxu0 0.0
          %709 = vmatpush1.msra.mxu0 0.0
          %710 = vmatprep.subr.mxu0 0.0
          %711 = vmatpush1.msra.mxu0 %v675
          %712 = vmatprep.subr.mxu0 0.0
          %713 = vmatpush1.msra.mxu0 %v674
          %714 = vmatprep.subr.mxu0 0.0
          %715 = vmatpush1.msra.mxu0 %v673
          %716 = vmatprep.subr.mxu0 0.0
          %717 = vmatpush1.msra.mxu0 %v672
          %718 = vmatprep.subr.mxu0 0.0
          %719 = vmatpush2.msra.mxu0 0.0
          %720 = vmatprep.subr.mxu0 0.0
          %721 = vmatpush2.msra.mxu0 0.0
          %722 = vmatprep.subr.mxu0 0.0
          %723 = vmatpush2.msra.mxu0 0.0
          %724 = vmatprep.subr.mxu0 0.0
          %725 = vmatpush2.msra.mxu0 0.0
          %726 = vmatprep.subr.mxu0 0.0
          %727 = vmatpush2.msra.mxu0 0.0
          %728 = vmatprep.subr.mxu0 0.0
          %729 = vmatpush2.msra.mxu0 0.0
          %730 = vmatprep.subr.mxu0 0.0
          %731 = vmatpush2.msra.mxu0 0.0
          %732 = vmatprep.subr.mxu0 0.0
          %733 = vmatpush2.msra.mxu0 0.0
          %734 = vmatprep.subr.mxu0 0.0
          %735 = vmatpush2.msra.mxu0 0.0
          %736 = vmatprep.subr.mxu0 0.0
          %737 = vmatpush2.msra.mxu0 0.0
          %738 = vmatprep.subr.mxu0 0.0
          %739 = vmatpush2.msra.mxu0 0.0
          %740 = vmatprep.subr.mxu0 0.0
          %741 = vmatpush2.msra.mxu0 0.0
          %742 = vmatprep.subr.mxu0 0.0
          %743 = vmatpush2.msra.mxu0 0.0
          %744 = vmatprep.subr.mxu0 0.0
          %745 = vmatpush2.msra.mxu0 0.0
          %746 = vmatprep.subr.mxu0 0.0
          %747 = vmatpush2.msra.mxu0 0.0
          %748 = vmatprep.subr.mxu0 0.0
          %749 = vmatpush2.msra.mxu0 0.0
          %750 = vmatprep.mubr.f32.mxu0 0.0
          %751 = vmatmul.mubr.f32.gmra.mxu0 %v684
          %v752 = vpop.f32.mrf.mxu0
          %v753 = vadd.f32 %v681, %v752
          %v754 = vpop.f32.mrf.mxu0
          %755 = vdwg.mxu0
          %v756 = vld [vmem:[%s417] sm:$0xff]
          %v757 = vmul.f32 %v753, %v756
          %v758 = vld [vmem:[#allocation10] sm:$0xff]
          %v759 = vld [vmem:[#allocation10 + $0x8] sm:$0xff]
          %v760 = vld [vmem:[#allocation10 + $0x10] sm:$0xff]
          %v761 = vld [vmem:[#allocation10 + $0x18] sm:$0xff]
          %v762 = vld [vmem:[#allocation10 + $0x20] sm:$0xff]
          %v763 = vld [vmem:[#allocation10 + $0x28] sm:$0xff]
          %v764 = vld [vmem:[#allocation10 + $0x30] sm:$0xff]
          %v765 = vld [vmem:[#allocation10 + $0x38] sm:$0xff]
          %v766 = vld [vmem:[#allocation10 + $0x40] sm:$0xff]
          %v767 = vld [vmem:[#allocation10 + $0x48] sm:$0xff]
          %v768 = vld [vmem:[#allocation10 + $0x50] sm:$0xff]
          %v769 = vld [vmem:[#allocation10 + $0x58] sm:$0xff]
          %v770 = vld [vmem:[#allocation10 + $0x60] sm:$0xff]
          %v771 = vld [vmem:[#allocation10 + $0x68] sm:$0xff]
          %v772 = vld [vmem:[#allocation10 + $0x70] sm:$0xff]
          %v773 = vld [vmem:[#allocation10 + $0x78] sm:$0xff]
          %774 = vmatprep.subr.mxu0 0.0
          %775 = vmatpush1.msra.mxu0 %v773
          %776 = vmatprep.subr.mxu0 0.0
          %777 = vmatpush1.msra.mxu0 %v772
          %778 = vmatprep.subr.mxu0 0.0
          %779 = vmatpush1.msra.mxu0 %v771
          %780 = vmatprep.subr.mxu0 0.0
          %781 = vmatpush1.msra.mxu0 %v770
          %782 = vmatprep.subr.mxu0 0.0
          %783 = vmatpush1.msra.mxu0 %v769
          %784 = vmatprep.subr.mxu0 0.0
          %785 = vmatpush1.msra.mxu0 %v768
          %786 = vmatprep.subr.mxu0 0.0
          %787 = vmatpush1.msra.mxu0 %v767
          %788 = vmatprep.subr.mxu0 0.0
          %789 = vmatpush1.msra.mxu0 %v766
          %790 = vmatprep.subr.mxu0 0.0
          %791 = vmatpush1.msra.mxu0 %v765
          %792 = vmatprep.subr.mxu0 0.0
          %793 = vmatpush1.msra.mxu0 %v764
          %794 = vmatprep.subr.mxu0 0.0
          %795 = vmatpush1.msra.mxu0 %v763
          %796 = vmatprep.subr.mxu0 0.0
          %797 = vmatpush1.msra.mxu0 %v762
          %798 = vmatprep.subr.mxu0 0.0
          %799 = vmatpush1.msra.mxu0 %v761
          %800 = vmatprep.subr.mxu0 0.0
          %801 = vmatpush1.msra.mxu0 %v760
          %802 = vmatprep.subr.mxu0 0.0
          %803 = vmatpush1.msra.mxu0 %v759
          %804 = vmatprep.subr.mxu0 0.0
          %805 = vmatpush1.msra.mxu0 %v758
          %806 = vmatprep.subr.mxu0 0.0
          %807 = vmatpush2.msra.mxu0 0.0
          %808 = vmatprep.subr.mxu0 0.0
          %809 = vmatpush2.msra.mxu0 0.0
          %810 = vmatprep.subr.mxu0 0.0
          %811 = vmatpush2.msra.mxu0 0.0
          %812 = vmatprep.subr.mxu0 0.0
          %813 = vmatpush2.msra.mxu0 0.0
          %814 = vmatprep.subr.mxu0 0.0
          %815 = vmatpush2.msra.mxu0 0.0
          %816 = vmatprep.subr.mxu0 0.0
          %817 = vmatpush2.msra.mxu0 0.0
          %818 = vmatprep.subr.mxu0 0.0
          %819 = vmatpush2.msra.mxu0 0.0
          %820 = vmatprep.subr.mxu0 0.0
          %821 = vmatpush2.msra.mxu0 0.0
          %822 = vmatprep.subr.mxu0 0.0
          %823 = vmatpush2.msra.mxu0 0.0
          %824 = vmatprep.subr.mxu0 0.0
          %825 = vmatpush2.msra.mxu0 0.0
          %826 = vmatprep.subr.mxu0 0.0
          %827 = vmatpush2.msra.mxu0 0.0
          %828 = vmatprep.subr.mxu0 0.0
          %829 = vmatpush2.msra.mxu0 0.0
          %830 = vmatprep.subr.mxu0 0.0
          %831 = vmatpush2.msra.mxu0 0.0
          %832 = vmatprep.subr.mxu0 0.0
          %833 = vmatpush2.msra.mxu0 0.0
          %834 = vmatprep.subr.mxu0 0.0
          %835 = vmatpush2.msra.mxu0 0.0
          %836 = vmatprep.subr.mxu0 0.0
          %837 = vmatpush2.msra.mxu0 0.0
          %838 = vmatprep.mubr.f32.mxu0 0.0
          %839 = vmatmul.mubr.f32.gmra.mxu0 %v757
          %v840 = vpop.f32.mrf.mxu0
          %v841 = vadd.f32 0.0, %v840
          %v842 = vpop.f32.mrf.mxu0
          %843 = vdwg.mxu0
          %844 = vst [vmem:[%s408] sm:$0xff] %v841
        $region76: #{tpu_custom_call.1} parent=51 // pred_fallthru
          _
        %s845 = sand.u32 %s232, 1
        %s846 = scalar_lea.sflag [#allocation5], %s845
        %s847 = sand.u32 %s232, 1
        %s848 = smul.addr %s847, 8
        %s849 = scalar_lea.vmem [#allocation11], %s848
        // Predicated region
        $region77: #{tpu_custom_call.1} parent=51 // pred_check
          %p850 = pneg %p242
        $region78: #{tpu_custom_call.1} parent=51 // pred_check_branch
          %852 = sbr.rel (%p850) target = $region80
        $region79: #{tpu_custom_call.1} parent=51 // pred_region
          %s854 = ssub.s32 128, 128
          %855 = vsyncadd %s846, %s854
          %s856 = smul.addr %s31, 128
          %s857 = scalar_lea.hbm %s8, %s856
          %s859 = sshll.u32 %s849, 4
          %s860 = int_to_ptr.vmem [resolvable:$true] %s859
          %862 = dma.vmem_to_hbm [thread:$0]  %s860, 128, %s857, %s846
        $region80: #{tpu_custom_call.1} parent=51 // pred_fallthru
          _
      $region52: #{tpu_custom_call.1} parent=5 // pred_fallthru
        _
      %p863 = scmp.le.s32.totalorder 2, %s22
      // Predicated region
      $region81: #{tpu_custom_call.1} parent=5 // pred_check
        %p864 = pneg %p863
      $region82: #{tpu_custom_call.1} parent=5 // pred_check_branch
        %866 = sbr.rel (%p864) target = $region84
      $region83: #{tpu_custom_call.1} parent=5 // pred_region
        %s867 = ssub.s32 %s22, 2
        // Predicated region
        $region85: #{tpu_custom_call.1} parent=83 // pred_check
          %p868 = pneg %p248
        $region86: #{tpu_custom_call.1} parent=83 // pred_check_branch
          %870 = sbr.rel (%p868) target = $region88
        $region87: #{tpu_custom_call.1} parent=83 // pred_region
          %s871 = sand.u32 %s233, 1
          %s872 = scalar_lea.sflag [#allocation5], %s871
          %s873 = sand.u32 %s233, 1
          %s874 = smul.addr %s873, 8
          %s875 = scalar_lea.vmem [#allocation11], %s874
          %876 = dma.done %s872, 128
        $region88: #{tpu_custom_call.1} parent=83 // pred_fallthru
          _
      $region84: #{tpu_custom_call.1} parent=5 // pred_fallthru
        _
    $region6: #{tpu_custom_call.1} parent=1 // loop_footer
      %s26 = sadd.s32 1, %s22
    $region7: #{tpu_custom_call.1} parent=1 // loop_footer_branch
      %21 = sbr.rel target = $region3
    $region8: #{tpu_custom_call.1} parent=1 // loop_exit
      _
    %877 = vsyncpa [#allocation4], 1
    %s878 = scalar_lea.sflag [#allocation4], 1
    %879 = vsyncpa %s878, 1
    %880 = vsyncpa [#allocation9], 1
    %881 = vsyncpa [#allocation5], 1
    %s882 = scalar_lea.sflag [#allocation5], 1
    %883 = vsyncpa %s882, 1
    %884 = vsyncpa [#allocation6], 1
    %s885 = scalar_lea.sflag [#allocation6], 1
    %886 = vsyncpa %s885, 1

</llo_original>
